<compile_context>
chip_gen: v6e
topology: v6e:2x2x1
jax: 0.10.0
libtpu: 0.0.40
codegen_flags: <defaults>
</compile_context>

<pallas_src>
import math
from functools import partial

import numpy as np
import jax
import jax.numpy as jnp
from jax.experimental import pallas as pl
from jax.experimental.pallas import tpu as pltpu


# ----------------------------- in-kernel math ------------------------------

_SQRT_2_OVER_PI = math.sqrt(2.0 / math.pi)


def _gelu(x):
    # tanh-approx GELU: the transcendental lands in the (otherwise idle) EUP slot.
    # TODO(synk): PyTorch F.gelu defaults to exact erf; Mosaic has no guaranteed
    # erf lowering, so the tanh approximation (<~3e-4 abs deviation per
    # activation) is used and verified against both references in __main__.
    return 0.5 * x * (1.0 + jnp.tanh(_SQRT_2_OVER_PI * (x + 0.044715 * x * x * x)))


def _encoder_kernel(x_ref, wa_ref, wb_ref, b_ref, o_ref, *, KR, D, kr_pad):
    """Whole batch in one VMEM-resident block.

    x_ref : (B, KMAX*Cin)        last-KMAX-step input, row j = c*KMAX + t
    wa_ref: (KMAX*Cin, KR + D)   [block-diag conv1 | residual folded through Wbig]
    wb_ref: (KR, kr_pad + D)     [block-diag conv2 | pad to 128 lanes | folded multi_cnn]
    b_ref : (1, 2*kr_pad + D)    [b1 | b2 | bfinal], 128-lane-aligned sections
    o_ref : (B, D)
    """
    x = x_ref[...]
    # Fused MXU pass: pointwise conv1 (block-diagonal over time segments) and the
    # residual path (pre-folded through the multi_cnn weights) share the same LHS.
    xw = jnp.dot(x, wa_ref[...], preferred_element_type=jnp.float32)     # (B, KR+D)
    h1 = _gelu(xw[:, :KR] + b_ref[:, 0:KR])
    # Pointwise conv2 (block-diagonal over time segments).
    h2 = _gelu(jnp.dot(h1, wb_ref[:, 0:KR], preferred_element_type=jnp.float32)
               + b_ref[:, kr_pad:kr_pad + KR])
    # multi_cnn causal taps + 1/NK branch mean (folded) + residual + folded bias.
    out = (jnp.dot(h2, wb_ref[:, kr_pad:kr_pad + D],
                   preferred_element_type=jnp.float32)
           + xw[:, KR:KR + D]
           + b_ref[:, 2 * kr_pad:2 * kr_pad + D])
    o_ref[...] = out                                                      # (B, D)


# ------------------------------- wrapper ------------------------------------

def causal_cnn_encoder(x_ncl, fparams, meta):
    """x_ncl: (B, C_in, L) float32 (PyTorch NCL layout). Returns (B, component_dims)."""
    WA, WB, BIAS = fparams
    KMAX, KR, D, kr_pad = meta["KMAX"], meta["KR"], meta["D"], meta["kr_pad"]
    B, Cin, L = x_ncl.shape
    assert L >= KMAX, "n_time_step must be >= max(kernel_list)"
    KC = KMAX * Cin

    # Only a contiguous tail slice + view reshape here: the time flip and the
    # (Cin, KMAX) -> (KMAX, Cin) transpose are baked into WA's row permutation.
    x_bd = x_ncl[:, :, L - KMAX:].reshape(B, KC).astype(jnp.float32)

    # Whole problem as one block, no grid / pipeline scaffolding.
    # TODO(synk): if B is scaled to many thousands of rows (stacked MPC rollouts),
    # tile B into a grid axis marked "parallel" (v7x megacore) with the weight
    # index_maps pinned to block (0, 0) so weights stay VMEM-resident.
    vmem = pl.BlockSpec(memory_space=pltpu.MemorySpace.VMEM)
    return pl.pallas_call(
        partial(_encoder_kernel, KR=KR, D=D, kr_pad=kr_pad),
        out_shape=jax.ShapeDtypeStruct((B, D), jnp.float32),
        in_specs=[vmem, vmem, vmem, vmem],
        out_specs=vmem,
    )(x_bd, WA, WB, BIAS)


# --------------------------- parameter plumbing ------------------------------

def _weight_norm(v):
    # torch.nn.utils.weight_norm (dim=0) at init: g = ||v|| over dims (1,2),
    # w = g * v / ||v||  (identity at init; kept for fidelity).
    norm = jnp.sqrt(jnp.sum(v * v, axis=(1, 2), keepdims=True))
    return norm * v / norm


def init_params(key, in_channels, reduced_size, component_dims, kernel_list):
    """Deterministic synthetic parameters in PyTorch Conv1d layout (out, in, k)."""
    R, D, Cin = reduced_size, component_dims, in_channels
    ks = jax.random.split(key, 6 + 2 * len(kernel_list))

    def rnd(k, shape, scale=0.2):
        return scale * jax.random.normal(k, shape, jnp.float32)

    return dict(
        conv1_w=_weight_norm(rnd(ks[0], (R, Cin, 1))), conv1_b=rnd(ks[1], (R,)),
        conv2_w=_weight_norm(rnd(ks[2], (R, R, 1))),   conv2_b=rnd(ks[3], (R,)),
        res_w=_weight_norm(rnd(ks[4], (R, Cin, 1))),   res_b=rnd(ks[5], (R,)),
        mc_w=[rnd(ks[6 + i], (D, R, k)) for i, k in enumerate(kernel_list)],
        mc_b=[rnd(ks[6 + len(kernel_list) + i], (D,))
              for i in range(len(kernel_list))],
    )


def fold_params(p, kernel_list):
    """Pre-fold PyTorch-layout params into the kernel's 3 fused weight operands."""
    W1 = np.asarray(p["conv1_w"])[:, :, 0].T        # (Cin, R)
    W2 = np.asarray(p["conv2_w"])[:, :, 0].T        # (R, R)
    Wres = np.asarray(p["res_w"])[:, :, 0].T        # (Cin, R)
    b1 = np.asarray(p["conv1_b"])
    b2 = np.asarray(p["conv2_b"])
    bres = np.asarray(p["res_b"])

    Cin, R = W1.shape
    D = np.asarray(p["mc_w"][0]).shape[0]
    NK, KMAX = len(kernel_list), max(kernel_list)
    KC, KR = KMAX * Cin, KMAX * R
    LANE = 128
    kr_pad = ((KR + LANE - 1) // LANE) * LANE       # 128-lane-aligned section start

    # x_bd row layout (see wrapper): row j = c*KMAX + t, t = forward-time index
    # within the last-KMAX window (timestep L-KMAX+t). Segment s = KMAX-1-t is the
    # shift back from the last step (timestep L-1-s). h1/h2 columns are
    # segment-major: col = s*R + r. Flip/transpose live HERE, not in per-call XLA.
    Wa = np.zeros((KC, KR), np.float32)
    Wr = np.zeros((KC, KR), np.float32)
    for t in range(KMAX):
        s = KMAX - 1 - t
        for c in range(Cin):
            Wa[c * KMAX + t, s * R:(s + 1) * R] = W1[c]
            Wr[c * KMAX + t, s * R:(s + 1) * R] = Wres[c]

    W2bd = np.zeros((KR, KR), np.float32)           # block-diag pointwise conv2
    for s in range(KMAX):
        W2bd[s * R:(s + 1) * R, s * R:(s + 1) * R] = W2

    # multi_cnn taps + 1/NK branch mean folded into one (KR, D) matrix.
    # Segment s == timestep L-1-s; torch tap j of a width-k conv hits s = k-1-j.
    Wbig = np.zeros((KR, D), np.float32)
    for i, k in enumerate(kernel_list):
        w = np.asarray(p["mc_w"][i])                # (D, R, k)
        for s in range(k):
            Wbig[s * R:(s + 1) * R, :] += w[:, :, k - 1 - s].T / NK
    bbig = np.mean(np.stack([np.asarray(b) for b in p["mc_b"]]), axis=0).reshape(1, D)

    # Residual path is linear, fold it through Wbig:
    #   (h2 + x@Wr + bres) @ Wbig = h2@Wbig + x@(Wr@Wbig) + bres@Wbig
    Wres_fold = (Wr @ Wbig).astype(np.float32)                       # (KC, D)
    bfinal = (bbig + np.tile(bres, KMAX).reshape(1, KR) @ Wbig)      # (1, D)

    # ---- pack into the 3 fused kernel operands ----
    WA_cat = np.concatenate([Wa, Wres_fold], axis=1)                 # (KC, KR+D)
    WB_cat = np.zeros((KR, kr_pad + D), np.float32)                  # (KR, 128+D)
    WB_cat[:, :KR] = W2bd
    WB_cat[:, kr_pad:kr_pad + D] = Wbig
    bias_cat = np.zeros((1, 2 * kr_pad + D), np.float32)
    bias_cat[:, 0:KR] = np.tile(b1, KMAX)
    bias_cat[:, kr_pad:kr_pad + KR] = np.tile(b2, KMAX)
    bias_cat[:, 2 * kr_pad:2 * kr_pad + D] = bfinal

    fparams = (jnp.asarray(WA_cat, jnp.float32),
               jnp.asarray(WB_cat, jnp.float32),
               jnp.asarray(bias_cat, jnp.float32))
    meta = dict(KMAX=KMAX, KR=KR, D=D, kr_pad=kr_pad)
    return fparams, meta


# --------------------------- pure-JAX reference ------------------------------

def reference_forward(x_ncl, p, kernel_list, approximate_gelu):
    gelu = lambda v: jax.nn.gelu(v, approximate=approximate_gelu)
    B, Cin, L = x_ncl.shape
    xt = jnp.transpose(x_ncl, (0, 2, 1))                          # (B, L, Cin)
    h1 = gelu(xt @ p["conv1_w"][:, :, 0].T + p["conv1_b"])
    h2 = gelu(h1 @ p["conv2_w"][:, :, 0].T + p["conv2_b"])
    xh = h2 + (xt @ p["res_w"][:, :, 0].T + p["res_b"])           # (B, L, R)
    outs = []
    for i, k in enumerate(kernel_list):
        w = p["mc_w"][i]                                          # (D, R, k)
        out = jnp.zeros((B, L, w.shape[0]), jnp.float32) + p["mc_b"][i]
        for j in range(k):
            shift = (k - 1) - j
            xs = jnp.pad(xh, ((0, 0), (shift, 0), (0, 0)))[:, :L, :]
            out = out + xs @ w[:, :, j].T
        outs.append(out)
    trend = sum(outs) / len(outs)
    return trend[:, -1, :]


# ---------------------------------- main -------------------------------------

if __name__ == "__main__":
    B, Cin, L = 2, 4, 10                 # n_time_step = 10 in the module
    reduced_size, component_dims = 8, 16
    kernel_list = [1, 2, 4]

    key = jax.random.PRNGKey(0)
    kx, kp = jax.random.split(key)
    x_h = jax.random.normal(kx, (B, Cin, L), jnp.float32)         # (B, C, L)

    torch_params = init_params(kp, Cin, reduced_size, component_dims, kernel_list)
    fparams, meta = fold_params(torch_params, kernel_list)

    encode = jax.jit(lambda xs: causal_cnn_encoder(xs, fparams, meta))
    latent = jax.block_until_ready(encode(x_h))
    assert latent.shape == (B, component_dims)

    # 1) Algebra check: reference using the same (tanh) GELU variant as the kernel.
    ref_tanh = reference_forward(x_h, torch_params, kernel_list, approximate_gelu=True)
    np.testing.assert_allclose(np.asarray(latent), np.asarray(ref_tanh),
                               atol=5e-4, rtol=5e-4)
    # 2) PyTorch-semantics check: exact-erf GELU (F.gelu default); looser tolerance
    #    absorbs the tanh-approx GELU deviation (~3e-4 per activation).
    ref_erf = reference_forward(x_h, torch_params, kernel_list, approximate_gelu=False)
    np.testing.assert_allclose(np.asarray(latent), np.asarray(ref_erf),
                               atol=5e-3, rtol=5e-3)
    print("KERNEL_OK")
</pallas_src>

<mosaic_0001>
module attributes {stable_mosaic.version = 11 : i64} {
  func.func @_encoder_kernel(%arg0: memref<2x16xf32, #tpu.memory_space<vmem>>, %arg1: memref<16x48xf32, #tpu.memory_space<vmem>>, %arg2: memref<32x144xf32, #tpu.memory_space<vmem>>, %arg3: memref<1x272xf32, #tpu.memory_space<vmem>>, %arg4: memref<2x16xf32, #tpu.memory_space<vmem>>) attributes {dimension_semantics = [], scalar_prefetch = 0 : i64, scratch_operands = 0 : i64, tpu.core_type = #tpu.core_type<tc>} {
    %c0 = arith.constant 0 : index
    %c0_0 = arith.constant 0 : index
    %0 = vector.load %arg0[%c0, %c0_0] : memref<2x16xf32, #tpu.memory_space<vmem>>, vector<2x16xf32>
    %c0_1 = arith.constant 0 : index
    %c0_2 = arith.constant 0 : index
    %1 = vector.load %arg1[%c0_1, %c0_2] : memref<16x48xf32, #tpu.memory_space<vmem>>, vector<16x48xf32>
    %cst = arith.constant dense<0.000000e+00> : vector<2x48xf32>
    %2 = tpu.matmul %0, %1, %cst {dimension_numbers = #tpu.dot_dimension_numbers<[1], [0], [0], [1], [0, 0, 1, 1], [], []>} : vector<2x16xf32>, vector<16x48xf32>, vector<2x48xf32> -> vector<2x48xf32>
    %3 = vector.extract_strided_slice %2 {offsets = [0, 0], sizes = [2, 32], strides = [1, 1]} : vector<2x48xf32> to vector<2x32xf32>
    %c0_3 = arith.constant 0 : index
    %c0_4 = arith.constant 0 : index
    %4 = vector.load %arg3[%c0_3, %c0_4] : memref<1x272xf32, #tpu.memory_space<vmem>>, vector<1x32xf32>
    %5 = vector.broadcast %4 : vector<1x32xf32> to vector<2x32xf32>
    %6 = arith.addf %3, %5 : vector<2x32xf32>
    %cst_5 = arith.constant 5.000000e-01 : f32
    %7 = vector.broadcast %cst_5 : f32 to vector<2x32xf32>
    %8 = arith.mulf %7, %6 : vector<2x32xf32>
    %cst_6 = arith.constant 4.471500e-02 : f32
    %9 = vector.broadcast %cst_6 : f32 to vector<2x32xf32>
    %10 = arith.mulf %9, %6 : vector<2x32xf32>
    %11 = arith.mulf %10, %6 : vector<2x32xf32>
    %12 = arith.mulf %11, %6 : vector<2x32xf32>
    %13 = arith.addf %6, %12 : vector<2x32xf32>
    %cst_7 = arith.constant 0.797884583 : f32
    %14 = vector.broadcast %cst_7 : f32 to vector<2x32xf32>
    %15 = arith.mulf %14, %13 : vector<2x32xf32>
    %16 = math.tanh %15 : vector<2x32xf32>
    %cst_8 = arith.constant 1.000000e+00 : f32
    %17 = vector.broadcast %cst_8 : f32 to vector<2x32xf32>
    %18 = arith.addf %17, %16 : vector<2x32xf32>
    %19 = arith.mulf %8, %18 : vector<2x32xf32>
    %c0_9 = arith.constant 0 : index
    %c0_10 = arith.constant 0 : index
    %20 = vector.load %arg2[%c0_9, %c0_10] : memref<32x144xf32, #tpu.memory_space<vmem>>, vector<32x32xf32>
    %cst_11 = arith.constant dense<0.000000e+00> : vector<2x32xf32>
    %21 = tpu.matmul %19, %20, %cst_11 {dimension_numbers = #tpu.dot_dimension_numbers<[1], [0], [0], [1], [0, 0, 1, 1], [], []>} : vector<2x32xf32>, vector<32x32xf32>, vector<2x32xf32> -> vector<2x32xf32>
    %c0_12 = arith.constant 0 : index
    %c128 = arith.constant 128 : index
    %22 = vector.load %arg3[%c0_12, %c128] : memref<1x272xf32, #tpu.memory_space<vmem>>, vector<1x32xf32>
    %23 = vector.broadcast %22 : vector<1x32xf32> to vector<2x32xf32>
    %24 = arith.addf %21, %23 : vector<2x32xf32>
    %cst_13 = arith.constant 5.000000e-01 : f32
    %25 = vector.broadcast %cst_13 : f32 to vector<2x32xf32>
    %26 = arith.mulf %25, %24 : vector<2x32xf32>
    %cst_14 = arith.constant 4.471500e-02 : f32
    %27 = vector.broadcast %cst_14 : f32 to vector<2x32xf32>
    %28 = arith.mulf %27, %24 : vector<2x32xf32>
    %29 = arith.mulf %28, %24 : vector<2x32xf32>
    %30 = arith.mulf %29, %24 : vector<2x32xf32>
    %31 = arith.addf %24, %30 : vector<2x32xf32>
    %cst_15 = arith.constant 0.797884583 : f32
    %32 = vector.broadcast %cst_15 : f32 to vector<2x32xf32>
    %33 = arith.mulf %32, %31 : vector<2x32xf32>
    %34 = math.tanh %33 : vector<2x32xf32>
    %cst_16 = arith.constant 1.000000e+00 : f32
    %35 = vector.broadcast %cst_16 : f32 to vector<2x32xf32>
    %36 = arith.addf %35, %34 : vector<2x32xf32>
    %37 = arith.mulf %26, %36 : vector<2x32xf32>
    %c0_17 = arith.constant 0 : index
    %c128_18 = arith.constant 128 : index
    %38 = vector.load %arg2[%c0_17, %c128_18] : memref<32x144xf32, #tpu.memory_space<vmem>>, vector<32x16xf32>
    %cst_19 = arith.constant dense<0.000000e+00> : vector<2x16xf32>
    %39 = tpu.matmul %37, %38, %cst_19 {dimension_numbers = #tpu.dot_dimension_numbers<[1], [0], [0], [1], [0, 0, 1, 1], [], []>} : vector<2x32xf32>, vector<32x16xf32>, vector<2x16xf32> -> vector<2x16xf32>
    %40 = vector.extract_strided_slice %2 {offsets = [0, 32], sizes = [2, 16], strides = [1, 1]} : vector<2x48xf32> to vector<2x16xf32>
    %41 = arith.addf %39, %40 : vector<2x16xf32>
    %c0_20 = arith.constant 0 : index
    %c256 = arith.constant 256 : index
    %42 = vector.load %arg3[%c0_20, %c256] : memref<1x272xf32, #tpu.memory_space<vmem>>, vector<1x16xf32>
    %43 = vector.broadcast %42 : vector<1x16xf32> to vector<2x16xf32>
    %44 = arith.addf %41, %43 : vector<2x16xf32>
    %c0_21 = arith.constant 0 : index
    %c0_22 = arith.constant 0 : index
    %45 = vector.load %arg4[%c0_21, %c0_22] : memref<2x16xf32, #tpu.memory_space<vmem>>, vector<2x16xf32>
    tpu.vector_store %arg4[%c0_21, %c0_22], %44 {strides = array<i32>} : memref<2x16xf32, #tpu.memory_space<vmem>>, vector<2x16xf32>,
    return
  }
}

</mosaic_0001>

<llo_original>
// kernel: _lambda_.1
$region0: #{_lambda_.1}
  #allocation0 [shape = 'u32[]', space=smem, size = 0x4, offset = 0x4, fixed_abs, tag = 'smem constant byte address 0x4 - core index']
  #allocation1 [shape = 'u32[144,128]{1,0:T(1,128)}', space=vmem, size = 0x12000, scoped, tag = 'internal scratch']
  %s0 = inlined_call_operand.vmem [shape: f32[2,16], index: 0, kind: input, shape index: {}]
  %s1 = inlined_call_operand.vmem [shape: f32[16,48], index: 1, kind: input, shape index: {}]
  %s2 = inlined_call_operand.hbm [shape: f32[32,144], index: 2, kind: input, shape index: {}]
  %s3 = inlined_call_operand.vmem [shape: f32[1,272], index: 3, kind: input, shape index: {}]
  %s4 = inlined_call_operand.hbm [shape: f32[2,16], index: 4, kind: output, shape index: {}]
  %s5 = sld [smem:[#allocation0]]
  $region30: #{_lambda_.1} parent=0
    _
  %s7 = ssub.s32 1, %s5
  %s8 = scalar_select 0, %s7, %s5
  $region1: #{_lambda_.1} parent=0
    #allocation2 [shape = 'u8[32768]{0}', space=vmem, size = 0x8000, scoped, tag = 'input window, operand 2, single buffered']
    #allocation3 [shape = 's32[1]{0}', space=sflag, size = 0x4, scoped, tag = 'scoped memory for _lambda_.1']
    #allocation4 [shape = 's32[1]{0}', space=sflag, size = 0x4, scoped, tag = 'scoped memory for _lambda_.1']
    #allocation5 [shape = 'u8[1024]{0}', space=vmem, size = 0x400, scoped, tag = 'output window, operand 0, single buffered']
    %9 = vsyncpa [#allocation3], 0
    %10 = vsyncpa [#allocation4], 0
    // Predicated region
    $region2: #{_lambda_.1} parent=1 // pred_check
      _
    $region3: #{_lambda_.1} parent=1 // pred_check_branch
      %12 = sbr.rel (0) target = $region5
    $region4: #{_lambda_.1} parent=1 // pred_region
      _
    $region5: #{_lambda_.1} parent=1 // pred_fallthru
      _
    // Predicated region
    $region6: #{_lambda_.1} parent=1 // pred_check
      _
    $region7: #{_lambda_.1} parent=1 // pred_check_branch
      %14 = sbr.rel (0) target = $region9
    $region8: #{_lambda_.1} parent=1 // pred_region
      _
    $region9: #{_lambda_.1} parent=1 // pred_fallthru
      _
    // Predicated region
    $region10: #{_lambda_.1} parent=1 // pred_check
      _
    $region11: #{_lambda_.1} parent=1 // pred_check_branch
      %16 = sbr.rel (0) target = $region13
    $region12: #{_lambda_.1} parent=1 // pred_region
      %s18 = ssub.s32 1024, 1024
      %19 = vsyncadd [#allocation3], %s18
      %s20 = sshll.u32 [#allocation2], 4
      %s21 = int_to_ptr.vmem [resolvable:$true] %s20
      %26 = dma.hbm_to_vmem [thread:$0]  %s2, 1024, %s21, [#allocation3], 256, 256, 16
    $region13: #{_lambda_.1} parent=1 // pred_fallthru
      _
    // Predicated region
    $region14: #{_lambda_.1} parent=1 // pred_check
      _
    $region15: #{_lambda_.1} parent=1 // pred_check_branch
      %28 = sbr.rel (0) target = $region17
    $region16: #{_lambda_.1} parent=1 // pred_region
      _
    $region17: #{_lambda_.1} parent=1 // pred_fallthru
      _
    // Predicated region
    $region18: #{_lambda_.1} parent=1 // pred_check
      _
    $region19: #{_lambda_.1} parent=1 // pred_check_branch
      %30 = sbr.rel (0) target = $region21
    $region20: #{_lambda_.1} parent=1 // pred_region
      %31 = dma.done [#allocation3], 1024
    $region21: #{_lambda_.1} parent=1 // pred_fallthru
      _
    %v32 = vld [vmem:[%s0] sm:$0x3]
    %v33 = vld [vmem:[%s1] sm:$0xff]
    %v34 = vld [vmem:[%s1 + $0x8] sm:$0xff]
    %vm35 = vcmask 130048
    %v37 = vsel %vm35, %v32, 0
    %39 = vmatprep.subr.mxu0 0.0
    %40 = vmatpush1.msra.mxu0 0.0
    %41 = vmatprep.subr.mxu0 0.0
    %42 = vmatpush1.msra.mxu0 0.0
    %43 = vmatprep.subr.mxu0 0.0
    %44 = vmatpush1.msra.mxu0 0.0
    %45 = vmatprep.subr.mxu0 0.0
    %46 = vmatpush1.msra.mxu0 0.0
    %47 = vmatprep.subr.mxu0 0.0
    %48 = vmatpush1.msra.mxu0 0.0
    %49 = vmatprep.subr.mxu0 0.0
    %50 = vmatpush1.msra.mxu0 0.0
    %51 = vmatprep.subr.mxu0 0.0
    %52 = vmatpush1.msra.mxu0 0.0
    %53 = vmatprep.subr.mxu0 0.0
    %54 = vmatpush1.msra.mxu0 0.0
    %55 = vmatprep.subr.mxu0 0.0
    %56 = vmatpush1.msra.mxu0 0.0
    %57 = vmatprep.subr.mxu0 0.0
    %58 = vmatpush1.msra.mxu0 0.0
    %59 = vmatprep.subr.mxu0 0.0
    %60 = vmatpush1.msra.mxu0 0.0
    %61 = vmatprep.subr.mxu0 0.0
    %62 = vmatpush1.msra.mxu0 0.0
    %63 = vmatprep.subr.mxu0 0.0
    %64 = vmatpush1.msra.mxu0 0.0
    %65 = vmatprep.subr.mxu0 0.0
    %66 = vmatpush1.msra.mxu0 0.0
    %67 = vmatprep.subr.mxu0 0.0
    %68 = vmatpush1.msra.mxu0 %v34
    %69 = vmatprep.subr.mxu0 0.0
    %70 = vmatpush1.msra.mxu0 %v33
    %71 = vmatprep.subr.mxu0 0.0
    %72 = vmatpush2.msra.mxu0 0.0
    %73 = vmatprep.subr.mxu0 0.0
    %74 = vmatpush2.msra.mxu0 0.0
    %75 = vmatprep.subr.mxu0 0.0
    %76 = vmatpush2.msra.mxu0 0.0
    %77 = vmatprep.subr.mxu0 0.0
    %78 = vmatpush2.msra.mxu0 0.0
    %79 = vmatprep.subr.mxu0 0.0
    %80 = vmatpush2.msra.mxu0 0.0
    %81 = vmatprep.subr.mxu0 0.0
    %82 = vmatpush2.msra.mxu0 0.0
    %83 = vmatprep.subr.mxu0 0.0
    %84 = vmatpush2.msra.mxu0 0.0
    %85 = vmatprep.subr.mxu0 0.0
    %86 = vmatpush2.msra.mxu0 0.0
    %87 = vmatprep.subr.mxu0 0.0
    %88 = vmatpush2.msra.mxu0 0.0
    %89 = vmatprep.subr.mxu0 0.0
    %90 = vmatpush2.msra.mxu0 0.0
    %91 = vmatprep.subr.mxu0 0.0
    %92 = vmatpush2.msra.mxu0 0.0
    %93 = vmatprep.subr.mxu0 0.0
    %94 = vmatpush2.msra.mxu0 0.0
    %95 = vmatprep.subr.mxu0 0.0
    %96 = vmatpush2.msra.mxu0 0.0
    %97 = vmatprep.subr.mxu0 0.0
    %98 = vmatpush2.msra.mxu0 0.0
    %99 = vmatprep.subr.mxu0 0.0
    %100 = vmatpush2.msra.mxu0 0.0
    %101 = vmatprep.subr.mxu0 0.0
    %102 = vmatpush2.msra.mxu0 0.0
    %103 = vmatprep.mubr.f32.mxu0 0.0
    %104 = vmatmul.mubr.f32.gmra.mxu0 %v37
    %v105 = vpop.f32.mrf.mxu0
    %v106 = vadd.f32 0.0, %v105
    %v107 = vpop.f32.mrf.mxu0
    %108 = vdwg.mxu0
    %v109 = vld [vmem:[%s3] sm:$0x1]
    %v111 = vlaneseq
    %v112 = vshrl.u32 %v111, 7
    %v113 = vsub.s32 0, %v112
    %v114 = vrot.slane %v109, %v113
    %v116 = vadd.f32 %v106, %v114
    %v117 = vmul.f32 %v116, 0.5
    %v118 = vmul.f32 %v116, 0.044715
    %v119 = vmul.f32 %v118, %v116
    %v120 = vmul.f32 %v119, %v116
    %v121 = vadd.f32 %v116, %v120
    %v122 = vmul.f32 %v121, 0.7978846
    %v123 = vtanh.pop %v122
    %v124 = vadd.f32 %v123, 1.0
    %v125 = vmul.f32 %v117, %v124
    %v126 = vld [vmem:[#allocation2] sm:$0xff]
    %v127 = vld [vmem:[#allocation2 + $0x10] sm:$0xff]
    %v128 = vld [vmem:[#allocation2 + $0x20] sm:$0xff]
    %v129 = vld [vmem:[#allocation2 + $0x30] sm:$0xff]
    %v130 = vld [vmem:[%s3 + $0x1] sm:$0x1]
    %v132 = vlaneseq
    %v133 = vshrl.u32 %v132, 7
    %v134 = vsub.s32 0, %v133
    %v135 = vrot.slane %v130, %v134
    %vm137 = vcmask 261120
    %v139 = vsel %vm137, %v125, 0
    %141 = vmatprep.subr.mxu0 0.0
    %142 = vmatpush1.msra.mxu0 0.0
    %143 = vmatprep.subr.mxu0 0.0
    %144 = vmatpush1.msra.mxu0 0.0
    %145 = vmatprep.subr.mxu0 0.0
    %146 = vmatpush1.msra.mxu0 0.0
    %147 = vmatprep.subr.mxu0 0.0
    %148 = vmatpush1.msra.mxu0 0.0
    %149 = vmatprep.subr.mxu0 0.0
    %150 = vmatpush1.msra.mxu0 0.0
    %151 = vmatprep.subr.mxu0 0.0
    %152 = vmatpush1.msra.mxu0 0.0
    %153 = vmatprep.subr.mxu0 0.0
    %154 = vmatpush1.msra.mxu0 0.0
    %155 = vmatprep.subr.mxu0 0.0
    %156 = vmatpush1.msra.mxu0 0.0
    %157 = vmatprep.subr.mxu0 0.0
    %158 = vmatpush1.msra.mxu0 0.0
    %159 = vmatprep.subr.mxu0 0.0
    %160 = vmatpush1.msra.mxu0 0.0
    %161 = vmatprep.subr.mxu0 0.0
    %162 = vmatpush1.msra.mxu0 0.0
    %163 = vmatprep.subr.mxu0 0.0
    %164 = vmatpush1.msra.mxu0 0.0
    %165 = vmatprep.subr.mxu0 0.0
    %166 = vmatpush1.msra.mxu0 %v129
    %167 = vmatprep.subr.mxu0 0.0
    %168 = vmatpush1.msra.mxu0 %v128
    %169 = vmatprep.subr.mxu0 0.0
    %170 = vmatpush1.msra.mxu0 %v127
    %171 = vmatprep.subr.mxu0 0.0
    %172 = vmatpush1.msra.mxu0 %v126
    %173 = vmatprep.subr.mxu0 0.0
    %174 = vmatpush2.msra.mxu0 0.0
    %175 = vmatprep.subr.mxu0 0.0
    %176 = vmatpush2.msra.mxu0 0.0
    %177 = vmatprep.subr.mxu0 0.0
    %178 = vmatpush2.msra.mxu0 0.0
    %179 = vmatprep.subr.mxu0 0.0
    %180 = vmatpush2.msra.mxu0 0.0
    %181 = vmatprep.subr.mxu0 0.0
    %182 = vmatpush2.msra.mxu0 0.0
    %183 = vmatprep.subr.mxu0 0.0
    %184 = vmatpush2.msra.mxu0 0.0
    %185 = vmatprep.subr.mxu0 0.0
    %186 = vmatpush2.msra.mxu0 0.0
    %187 = vmatprep.subr.mxu0 0.0
    %188 = vmatpush2.msra.mxu0 0.0
    %189 = vmatprep.subr.mxu0 0.0
    %190 = vmatpush2.msra.mxu0 0.0
    %191 = vmatprep.subr.mxu0 0.0
    %192 = vmatpush2.msra.mxu0 0.0
    %193 = vmatprep.subr.mxu0 0.0
    %194 = vmatpush2.msra.mxu0 0.0
    %195 = vmatprep.subr.mxu0 0.0
    %196 = vmatpush2.msra.mxu0 0.0
    %197 = vmatprep.subr.mxu0 0.0
    %198 = vmatpush2.msra.mxu0 0.0
    %199 = vmatprep.subr.mxu0 0.0
    %200 = vmatpush2.msra.mxu0 0.0
    %201 = vmatprep.subr.mxu0 0.0
    %202 = vmatpush2.msra.mxu0 0.0
    %203 = vmatprep.subr.mxu0 0.0
    %204 = vmatpush2.msra.mxu0 0.0
    %205 = vmatprep.mubr.f32.mxu0 0.0
    %206 = vmatmul.mubr.f32.gmra.mxu0 %v139
    %v207 = vpop.f32.mrf.mxu0
    %v208 = vadd.f32 %v135, %v207
    %v209 = vpop.f32.mrf.mxu0
    %210 = vdwg.mxu0
    %v211 = vmul.f32 %v208, 0.5
    %v212 = vmul.f32 %v208, 0.044715
    %v213 = vmul.f32 %v212, %v208
    %v214 = vmul.f32 %v213, %v208
    %v215 = vadd.f32 %v208, %v214
    %v216 = vmul.f32 %v215, 0.7978846
    %v217 = vtanh.pop %v216
    %v218 = vadd.f32 %v217, 1.0
    %v219 = vmul.f32 %v211, %v218
    %v220 = vld [vmem:[#allocation2 + $0x8] sm:$0xff]
    %v221 = vld [vmem:[#allocation2 + $0x18] sm:$0xff]
    %v222 = vld [vmem:[#allocation2 + $0x28] sm:$0xff]
    %v223 = vld [vmem:[#allocation2 + $0x38] sm:$0xff]
    %225 = vrot.lane.b32.xlu0 %v106, 96
    %v226 = vpop.permute.xlu0 %225
    %v229 = vsel %vm137, %v219, 0
    %231 = vmatprep.subr.mxu0 0.0
    %232 = vmatpush1.msra.mxu0 0.0
    %233 = vmatprep.subr.mxu0 0.0
    %234 = vmatpush1.msra.mxu0 0.0
    %235 = vmatprep.subr.mxu0 0.0
    %236 = vmatpush1.msra.mxu0 0.0
    %237 = vmatprep.subr.mxu0 0.0
    %238 = vmatpush1.msra.mxu0 0.0
    %239 = vmatprep.subr.mxu0 0.0
    %240 = vmatpush1.msra.mxu0 0.0
    %241 = vmatprep.subr.mxu0 0.0
    %242 = vmatpush1.msra.mxu0 0.0
    %243 = vmatprep.subr.mxu0 0.0
    %244 = vmatpush1.msra.mxu0 0.0
    %245 = vmatprep.subr.mxu0 0.0
    %246 = vmatpush1.msra.mxu0 0.0
    %247 = vmatprep.subr.mxu0 0.0
    %248 = vmatpush1.msra.mxu0 0.0
    %249 = vmatprep.subr.mxu0 0.0
    %250 = vmatpush1.msra.mxu0 0.0
    %251 = vmatprep.subr.mxu0 0.0
    %252 = vmatpush1.msra.mxu0 0.0
    %253 = vmatprep.subr.mxu0 0.0
    %254 = vmatpush1.msra.mxu0 0.0
    %255 = vmatprep.subr.mxu0 0.0
    %256 = vmatpush1.msra.mxu0 %v223
    %257 = vmatprep.subr.mxu0 0.0
    %258 = vmatpush1.msra.mxu0 %v222
    %259 = vmatprep.subr.mxu0 0.0
    %260 = vmatpush1.msra.mxu0 %v221
    %261 = vmatprep.subr.mxu0 0.0
    %262 = vmatpush1.msra.mxu0 %v220
    %263 = vmatprep.subr.mxu0 0.0
    %264 = vmatpush2.msra.mxu0 0.0
    %265 = vmatprep.subr.mxu0 0.0
    %266 = vmatpush2.msra.mxu0 0.0
    %267 = vmatprep.subr.mxu0 0.0
    %268 = vmatpush2.msra.mxu0 0.0
    %269 = vmatprep.subr.mxu0 0.0
    %270 = vmatpush2.msra.mxu0 0.0
    %271 = vmatprep.subr.mxu0 0.0
    %272 = vmatpush2.msra.mxu0 0.0
    %273 = vmatprep.subr.mxu0 0.0
    %274 = vmatpush2.msra.mxu0 0.0
    %275 = vmatprep.subr.mxu0 0.0
    %276 = vmatpush2.msra.mxu0 0.0
    %277 = vmatprep.subr.mxu0 0.0
    %278 = vmatpush2.msra.mxu0 0.0
    %279 = vmatprep.subr.mxu0 0.0
    %280 = vmatpush2.msra.mxu0 0.0
    %281 = vmatprep.subr.mxu0 0.0
    %282 = vmatpush2.msra.mxu0 0.0
    %283 = vmatprep.subr.mxu0 0.0
    %284 = vmatpush2.msra.mxu0 0.0
    %285 = vmatprep.subr.mxu0 0.0
    %286 = vmatpush2.msra.mxu0 0.0
    %287 = vmatprep.subr.mxu0 0.0
    %288 = vmatpush2.msra.mxu0 0.0
    %289 = vmatprep.subr.mxu0 0.0
    %290 = vmatpush2.msra.mxu0 0.0
    %291 = vmatprep.subr.mxu0 0.0
    %292 = vmatpush2.msra.mxu0 0.0
    %293 = vmatprep.subr.mxu0 0.0
    %294 = vmatpush2.msra.mxu0 0.0
    %295 = vmatprep.mubr.f32.mxu0 0.0
    %296 = vmatmul.mubr.f32.gmra.mxu0 %v229
    %v297 = vpop.f32.mrf.mxu0
    %v298 = vadd.f32 %v226, %v297
    %v299 = vpop.f32.mrf.mxu0
    %300 = vdwg.mxu0
    %v301 = vld [vmem:[%s3 + $0x2] sm:$0x1]
    %v303 = vlaneseq
    %v304 = vshrl.u32 %v303, 7
    %v305 = vsub.s32 0, %v304
    %v306 = vrot.slane %v301, %v305
    %v308 = vadd.f32 %v298, %v306
    %vm309 = vcmask 123904
    %310 = vst.msk [vmem:[#allocation5] sm:$0x3] %vm309, %v308
    // Predicated region
    $region22: #{_lambda_.1} parent=1 // pred_check
      _
    $region23: #{_lambda_.1} parent=1 // pred_check_branch
      %312 = sbr.rel (0) target = $region25
    $region24: #{_lambda_.1} parent=1 // pred_region
      %s314 = ssub.s32 32, 32
      %315 = vsyncadd [#allocation4], %s314
      %s317 = sshll.u32 [#allocation5], 4
      %s318 = int_to_ptr.vmem [resolvable:$true] %s317
      %320 = dma.vmem_to_hbm [thread:$0]  %s318, 32, %s4, [#allocation4]
    $region25: #{_lambda_.1} parent=1 // pred_fallthru
      _
    // Predicated region
    $region26: #{_lambda_.1} parent=1 // pred_check
      _
    $region27: #{_lambda_.1} parent=1 // pred_check_branch
      %322 = sbr.rel (0) target = $region29
    $region28: #{_lambda_.1} parent=1 // pred_region
      %323 = dma.done [#allocation4], 32
    $region29: #{_lambda_.1} parent=1 // pred_fallthru
      _
    %324 = vsyncpa [#allocation3], 1
    %325 = vsyncpa [#allocation4], 1

</llo_original>
